<compile_context>
chip_gen: v7x
topology: tpu7x:2x2x1
jax: 0.10.0
libtpu: 0.0.40
codegen_flags: <defaults>
</compile_context>

<pallas_src>
import functools

import jax
import jax.numpy as jnp
from jax.experimental import pallas as pl
from jax.experimental.pallas import tpu as pltpu


# ---------------------------------------------------------------------------
# Kernel
# ---------------------------------------------------------------------------
def _expand_kernel(x_ref, w_ref, b_ref, o_ref, *, k, emb, c, d_sz, w_tile, h_tile):
    """Expand one (h_tile, w_tile) slab of input points.

    x_ref: (h_tile, w_tile*D, C)          points, rows ordered (h, w, d) with d fastest
    w_ref: (C, k^3*E)                     deconv weight, cols ordered (ki, kj, kl, e)
    b_ref: (1, k^3*E)                     bias tiled over the k^3 kernel offsets
    o_ref: (h_tile, k, w_tile, k*D, k*E)  slab of the merged channels-last output view
    """
    ke = k * emb
    rows = h_tile * w_tile * d_sz
    # Load once; merging leading dims is layout-free.
    x_mat = x_ref[...].reshape(rows, c)                      # (rows, C)

    # Per-(ki,kj) matmul: k^2 small (rows, C) x (C, k*E) products instead of one
    # (rows, k^3*E) f32 intermediate -> k^2x less live VMEM/vreg pressure, same total
    # vmatmul count.  DEFAULT precision: C is tiny, the kernel is HBM-writeback bound and
    # single-pass bf16 MXU error is negligible here.
    for ki in range(k):
        for kj in range(k):
            col0 = (ki * k + kj) * ke                        # 128-aligned lane slice
            y = jnp.dot(x_mat, w_ref[:, col0:col0 + ke],
                        preferred_element_type=jnp.float32)  # (rows, k*E) f32
            y = y + b_ref[:, col0:col0 + ke]
            # Cast once right after the bias add (halves live bytes when out is bf16).
            seg = y.astype(o_ref.dtype).reshape(h_tile, w_tile, d_sz, ke)
            # Static-sliced, lane-dense store (last dim k*E); sublane offset kj*D.
            o_ref[:, ki, :, kj * d_sz:(kj + 1) * d_sz, :] = seg


# ---------------------------------------------------------------------------
# VMEM planning (generation-aware)
# ---------------------------------------------------------------------------
def _vmem_plan():
    """Return (tile_pick_budget_bytes, vmem_limit_bytes) for the current TPU generation."""
    mib = 1024 * 1024
    try:
        cap = int(pltpu.get_tpu_info().vmem_capacity_bytes)
    except Exception:
        cap = 64 * mib  # conservative (v7x-sized) fallback
    if cap >= 100 * mib:
        # v5e / v6e: 128 MiB per TensorCore -> big blocks, long DMAs.
        return 48 * mib, 96 * mib
    # v7x (64 MiB per TC) or unknown: leave headroom for Mosaic internal scratch.
    limit = min(32 * mib, max(cap // 2, 16 * mib))
    return 12 * mib, limit


def _pick_tiles(g, W, D, C, k, E, out_bytes, in_bytes, budget):
    """Co-select (h_tile, w_tile).

    Budgets: double-buffered input/output blocks, double-buffered (constant-index)
    weight+bias blocks, and the in-kernel per-(ki,kj) f32 intermediate + cast copy.
    Prefers >= 2 grid steps (even if possible) so v7x's two TensorCores stay busy.
    """
    k3 = k ** 3
    ke = k * E
    w_const = 2 * (C * k3 * E * in_bytes + k3 * E * 4)       # weight + bias, double-buffered

    def cost(h, w):
        rows = h * w * D
        out_blk = rows * (k ** 2) * ke * out_bytes
        in_blk = rows * C * in_bytes
        interm = rows * ke * (4 + out_bytes)                  # f32 segment + cast copy
        return 2 * (out_blk + in_blk) + w_const + interm, out_blk

    h_cands = [h for h in range(1, g + 1) if g % h == 0]
    # Second-minor input block dim is w*D: keep it sublane-aligned unless w == W.
    w_divs = [w for w in range(1, W + 1)
              if W % w == 0 and (w == W or (w * D) % 8 == 0)]
    # Ragged (non-divisor) fallback for awkward W (prime/odd); last block is masked.
    w_ragged = [w for w in range(2, W) if W % w != 0 and (w * D) % 8 == 0]

    def search(w_cands, best, best_key):
        for h in h_cands:
            for w in w_cands:
                total, out_blk = cost(h, w)
                if total > budget:
                    continue
                steps = (g // h) * (-(-W // w))
                key = ((steps >= 2) or (g * W < 2),   # keep both v7x TCs fed
                       out_blk,                       # bigger blocks -> longer DMAs
                       steps % 2 == 0)                # balanced halves on v7x
                if best_key is None or key > best_key:
                    best, best_key = (h, w), key
        return best, best_key

    fallback = (1, 1 if (W == 1 or D % 8 == 0) else W)
    best, key = search(w_divs, fallback, None)
    if best[1] == 1 and w_ragged:
        best, key = search(w_ragged, best, key)
    return best


# ---------------------------------------------------------------------------
# pallas_call wrapper
# ---------------------------------------------------------------------------
def _point_expand(x_flat, w2, b2, *, g, W, D, C, k, E, h_tile, w_tile,
                  out_dtype, vmem_limit):
    kernel = functools.partial(_expand_kernel, k=k, emb=E, c=C, d_sz=D,
                               w_tile=w_tile, h_tile=h_tile)
    grid = (g // h_tile, pl.cdiv(W, w_tile))
    return pl.pallas_call(
        kernel,
        out_shape=jax.ShapeDtypeStruct((g, k, W, k * D, k * E), out_dtype),
        grid=grid,
        in_specs=[
            pl.BlockSpec((h_tile, w_tile * D, C), lambda i, j: (i, j, 0)),
            # Constant-index weight/bias blocks (small; stay resident across steps).
            # TODO(synk): pipeline_mode=pl.Buffered(1) would reclaim the redundant second
            # buffer (only meaningful on v7x); left default to avoid lowering risk.
            pl.BlockSpec((C, k ** 3 * E), lambda i, j: (0, 0)),
            pl.BlockSpec((1, k ** 3 * E), lambda i, j: (0, 0)),
        ],
        out_specs=pl.BlockSpec((h_tile, k, w_tile, k * D, k * E),
                               lambda i, j: (i, 0, j, 0, 0)),
        compiler_params=pltpu.CompilerParams(
            dimension_semantics=("parallel", "parallel"),
            vmem_limit_bytes=vmem_limit),
    )(x_flat, w2, b2)


# ---------------------------------------------------------------------------
# Module wrapper
# ---------------------------------------------------------------------------
class PointExpanderPallas:
    """JAX/Pallas equivalent of PointExpander (ConvTranspose3d, k == stride, pad 0).

    Perf knobs:
      matmul_dtype=jnp.bfloat16  -> bf16 x/w on the MXU, f32 accumulate.
      out_dtype=jnp.bfloat16     -> halves output writeback bytes (kernel is writeback-bound).
      channels_last=True (call)  -> skip the full-output NCDHW moveaxis (fast path).
    Prefer D a multiple of 8 (f32 out) / 16 (bf16 out) for packed, unmasked stores.
    """

    def __init__(self, patch_size, stride, in_chans, embed_dim, key,
                 *, matmul_dtype=None, out_dtype=None):
        assert patch_size == stride, "kernel implements the non-overlapping (k == stride) case"
        self.k = patch_size
        self.in_chans = in_chans
        self.embed_dim = embed_dim
        self.matmul_dtype = matmul_dtype
        self.out_dtype = out_dtype

        kw, kb = jax.random.split(key)
        # PyTorch ConvTranspose3d weight shape: [in_chans, embed_dim, k, k, k]
        fan = in_chans * self.k ** 3
        bound = 1.0 / (fan ** 0.5)
        self.weight = jax.random.uniform(
            kw, (in_chans, embed_dim, self.k, self.k, self.k),
            minval=-bound, maxval=bound, dtype=jnp.float32)
        self.bias = jax.random.uniform(
            kb, (embed_dim,), minval=-bound, maxval=bound, dtype=jnp.float32)

        # Hoisted kernel operands: weight flattened with (ki, kj, kl, e) fastest-varying
        # column order (channels-last kernel output), bias tiled over the k^3 offsets.
        k3 = self.k ** 3
        self.w2 = jnp.transpose(self.weight, (0, 2, 3, 4, 1)).reshape(in_chans, k3 * embed_dim)
        self.b2 = jnp.tile(self.bias, k3).reshape(1, k3 * embed_dim)
        if matmul_dtype is not None:
            self.w2 = self.w2.astype(matmul_dtype)

    def __call__(self, x, channels_last=False):
        # x: [B, C_in, H, W, D]
        B, C, H, W, D = x.shape
        k, E = self.k, self.embed_dim
        assert C == self.in_chans
        out_dtype = self.out_dtype if self.out_dtype is not None else x.dtype

        # Input glue (tiny tensor, negligible traffic): [B,C,H,W,D] -> [B*H, W*D, C].
        x_flat = jnp.transpose(x, (0, 2, 3, 4, 1)).reshape(B * H, W * D, C)
        if self.matmul_dtype is not None:
            x_flat = x_flat.astype(self.matmul_dtype)

        g = B * H
        in_bytes = jnp.dtype(x_flat.dtype).itemsize
        out_bytes = jnp.dtype(out_dtype).itemsize
        budget, vmem_limit = _vmem_plan()
        h_tile, w_tile = _pick_tiles(g, W, D, C, k, E, out_bytes, in_bytes, budget)

        out4 = _point_expand(x_flat, self.w2, self.b2,
                             g=g, W=W, D=D, C=C, k=k, E=E,
                             h_tile=h_tile, w_tile=w_tile,
                             out_dtype=out_dtype, vmem_limit=vmem_limit)

        # Free reshape (adjacent-dim merges only) to channels-last [B, H*k, W*k, D*k, E].
        out_cl = out4.reshape(B, H * k, W * k, D * k, E)
        if channels_last:
            return out_cl
        # NCDHW (PyTorch) layout needs one full-output permute; avoid via channels_last=True.
        return jnp.moveaxis(out_cl, -1, 1)


# ---------------------------------------------------------------------------
# Reference + self-test
# ---------------------------------------------------------------------------
def _reference(x, weight, bias, k):
    # Pure-JAX reference of ConvTranspose3d with kernel == stride, padding == 0 (NCDHW).
    B, C, H, W, D = x.shape
    E = weight.shape[1]
    out = jnp.einsum('bchwd,cexyz->bhwdexyz', x, weight,
                     precision=jax.lax.Precision.HIGHEST)
    out = out + bias[None, None, None, None, :, None, None, None]
    out = jnp.transpose(out, (0, 4, 1, 5, 2, 6, 3, 7))
    return out.reshape(B, E, H * k, W * k, D * k)


if __name__ == "__main__":
    key = jax.random.PRNGKey(0)
    k_param, k_param2, k_input, k_input2 = jax.random.split(key, 4)

    # --- f32 path ----------------------------------------------------------
    B, C_in, H, W, D = 2, 4, 4, 4, 8
    patch_size = stride = 2
    embed_dim = 128

    module = PointExpanderPallas(patch_size, stride, C_in, embed_dim, k_param)
    x = jax.random.normal(k_input, (B, C_in, H, W, D), dtype=jnp.float32)

    out = jax.block_until_ready(module(x))
    assert out.shape == (B, embed_dim, H * stride, W * stride, D * stride), out.shape

    ref = _reference(x, module.weight, module.bias, patch_size)
    # DEFAULT-precision (single-pass bf16 MXU) matmul with C=4: error << tolerance;
    # placement bugs would produce O(1) errors and still fail this check.
    assert jnp.allclose(out, ref, atol=3e-2, rtol=3e-2), float(jnp.max(jnp.abs(out - ref)))

    # Kernel-native channels-last path (no final permute) — the recommended fast path.
    out_cl = jax.block_until_ready(module(x, channels_last=True))
    ref_cl = jnp.moveaxis(ref, 1, -1)
    assert out_cl.shape == (B, H * stride, W * stride, D * stride, embed_dim), out_cl.shape
    assert jnp.allclose(out_cl, ref_cl, atol=3e-2, rtol=3e-2), \
        float(jnp.max(jnp.abs(out_cl - ref_cl)))

    # --- bf16 matmul + bf16 output path (halved writeback bytes) -----------
    D2 = 16  # multiple of 16 keeps bf16 stores packed
    module_bf16 = PointExpanderPallas(patch_size, stride, C_in, embed_dim, k_param2,
                                      matmul_dtype=jnp.bfloat16, out_dtype=jnp.bfloat16)
    x2 = jax.random.normal(k_input2, (B, C_in, H, W, D2), dtype=jnp.float32)
    out2 = jax.block_until_ready(module_bf16(x2, channels_last=True))
    assert out2.dtype == jnp.bfloat16
    assert out2.shape == (B, H * stride, W * stride, D2 * stride, embed_dim), out2.shape
    ref2 = jnp.moveaxis(_reference(x2, module_bf16.weight, module_bf16.bias, patch_size), 1, -1)
    err2 = float(jnp.max(jnp.abs(out2.astype(jnp.float32) - ref2)))
    assert jnp.allclose(out2.astype(jnp.float32), ref2, atol=5e-2, rtol=5e-2), err2

    print("KERNEL_OK")
</pallas_src>

<mosaic_0001>
module attributes {stable_mosaic.version = 11 : i64} {
  func.func @_expand_kernel(%arg0: i32, %arg1: i32, %arg2: memref<4x32x4xf32, #tpu.memory_space<vmem>>, %arg3: memref<4x1024xf32, #tpu.memory_space<vmem>>, %arg4: memref<1x1024xf32, #tpu.memory_space<vmem>>, %arg5: memref<4x2x4x16x256xf32, #tpu.memory_space<vmem>>) attributes {dimension_semantics = [#tpu.dimension_semantics<parallel>, #tpu.dimension_semantics<parallel>], iteration_bounds = array<i64: 2, 1>, scalar_prefetch = 0 : i64, scratch_operands = 0 : i64, tpu.core_type = #tpu.core_type<tc>, window_params = [{transform_indices = @transform_0, window_bounds = array<i64: 4, 32, 4>}, {pipeline_mode = #tpu.pipeline_mode<synchronous>, transform_indices = @transform_1, window_bounds = array<i64: 4, 1024>}, {pipeline_mode = #tpu.pipeline_mode<synchronous>, transform_indices = @transform_2, window_bounds = array<i64: 1, 1024>}, {transform_indices = @transform_3, window_bounds = array<i64: 4, 2, 4, 16, 256>}]} {
    %c0 = arith.constant 0 : index
    %c0_0 = arith.constant 0 : index
    %c0_1 = arith.constant 0 : index
    %0 = vector.load %arg2[%c0, %c0_0, %c0_1] : memref<4x32x4xf32, #tpu.memory_space<vmem>>, vector<4x32x4xf32>
    %1 = vector.shape_cast %0 : vector<4x32x4xf32> to vector<128x4xf32>
    %c0_2 = arith.constant 0 : index
    %c0_3 = arith.constant 0 : index
    %2 = vector.load %arg3[%c0_2, %c0_3] : memref<4x1024xf32, #tpu.memory_space<vmem>>, vector<4x256xf32>
    %cst = arith.constant dense<0.000000e+00> : vector<128x256xf32>
    %3 = tpu.matmul %1, %2, %cst {dimension_numbers = #tpu.dot_dimension_numbers<[1], [0], [0], [1], [0, 0, 1, 1], [], []>} : vector<128x4xf32>, vector<4x256xf32>, vector<128x256xf32> -> vector<128x256xf32>
    %c0_4 = arith.constant 0 : index
    %c0_5 = arith.constant 0 : index
    %4 = vector.load %arg4[%c0_4, %c0_5] : memref<1x1024xf32, #tpu.memory_space<vmem>>, vector<1x256xf32>
    %5 = vector.broadcast %4 : vector<1x256xf32> to vector<128x256xf32>
    %6 = arith.addf %3, %5 : vector<128x256xf32>
    %7 = vector.shape_cast %6 : vector<128x256xf32> to vector<4x4x8x256xf32>
    %c0_6 = arith.constant 0 : index
    %c0_7 = arith.constant 0 : index
    %c0_8 = arith.constant 0 : index
    %c0_9 = arith.constant 0 : index
    %c0_10 = arith.constant 0 : index
    %8 = vector.load %arg5[%c0_6, %c0_7, %c0_8, %c0_9, %c0_10] : memref<4x2x4x16x256xf32, #tpu.memory_space<vmem>>, vector<4x1x4x8x256xf32>
    %9 = vector.shape_cast %8 : vector<4x1x4x8x256xf32> to vector<4x4x8x256xf32>
    %10 = vector.shape_cast %7 : vector<4x4x8x256xf32> to vector<4x1x4x8x256xf32>
    tpu.vector_store %arg5[%c0_6, %c0_7, %c0_8, %c0_9, %c0_10], %10 {strides = array<i32>} : memref<4x2x4x16x256xf32, #tpu.memory_space<vmem>>, vector<4x1x4x8x256xf32>,
    %c0_11 = arith.constant 0 : index
    %c256 = arith.constant 256 : index
    %11 = vector.load %arg3[%c0_11, %c256] : memref<4x1024xf32, #tpu.memory_space<vmem>>, vector<4x256xf32>
    %cst_12 = arith.constant dense<0.000000e+00> : vector<128x256xf32>
    %12 = tpu.matmul %1, %11, %cst_12 {dimension_numbers = #tpu.dot_dimension_numbers<[1], [0], [0], [1], [0, 0, 1, 1], [], []>} : vector<128x4xf32>, vector<4x256xf32>, vector<128x256xf32> -> vector<128x256xf32>
    %c0_13 = arith.constant 0 : index
    %c256_14 = arith.constant 256 : index
    %13 = vector.load %arg4[%c0_13, %c256_14] : memref<1x1024xf32, #tpu.memory_space<vmem>>, vector<1x256xf32>
    %14 = vector.broadcast %13 : vector<1x256xf32> to vector<128x256xf32>
    %15 = arith.addf %12, %14 : vector<128x256xf32>
    %16 = vector.shape_cast %15 : vector<128x256xf32> to vector<4x4x8x256xf32>
    %c0_15 = arith.constant 0 : index
    %c0_16 = arith.constant 0 : index
    %c0_17 = arith.constant 0 : index
    %c8 = arith.constant 8 : index
    %c0_18 = arith.constant 0 : index
    %17 = vector.load %arg5[%c0_15, %c0_16, %c0_17, %c8, %c0_18] : memref<4x2x4x16x256xf32, #tpu.memory_space<vmem>>, vector<4x1x4x8x256xf32>
    %18 = vector.shape_cast %17 : vector<4x1x4x8x256xf32> to vector<4x4x8x256xf32>
    %19 = vector.shape_cast %16 : vector<4x4x8x256xf32> to vector<4x1x4x8x256xf32>
    tpu.vector_store %arg5[%c0_15, %c0_16, %c0_17, %c8, %c0_18], %19 {strides = array<i32>} : memref<4x2x4x16x256xf32, #tpu.memory_space<vmem>>, vector<4x1x4x8x256xf32>,
    %c0_19 = arith.constant 0 : index
    %c512 = arith.constant 512 : index
    %20 = vector.load %arg3[%c0_19, %c512] : memref<4x1024xf32, #tpu.memory_space<vmem>>, vector<4x256xf32>
    %cst_20 = arith.constant dense<0.000000e+00> : vector<128x256xf32>
    %21 = tpu.matmul %1, %20, %cst_20 {dimension_numbers = #tpu.dot_dimension_numbers<[1], [0], [0], [1], [0, 0, 1, 1], [], []>} : vector<128x4xf32>, vector<4x256xf32>, vector<128x256xf32> -> vector<128x256xf32>
    %c0_21 = arith.constant 0 : index
    %c512_22 = arith.constant 512 : index
    %22 = vector.load %arg4[%c0_21, %c512_22] : memref<1x1024xf32, #tpu.memory_space<vmem>>, vector<1x256xf32>
    %23 = vector.broadcast %22 : vector<1x256xf32> to vector<128x256xf32>
    %24 = arith.addf %21, %23 : vector<128x256xf32>
    %25 = vector.shape_cast %24 : vector<128x256xf32> to vector<4x4x8x256xf32>
    %c0_23 = arith.constant 0 : index
    %c1 = arith.constant 1 : index
    %c0_24 = arith.constant 0 : index
    %c0_25 = arith.constant 0 : index
    %c0_26 = arith.constant 0 : index
    %26 = vector.load %arg5[%c0_23, %c1, %c0_24, %c0_25, %c0_26] : memref<4x2x4x16x256xf32, #tpu.memory_space<vmem>>, vector<4x1x4x8x256xf32>
    %27 = vector.shape_cast %26 : vector<4x1x4x8x256xf32> to vector<4x4x8x256xf32>
    %28 = vector.shape_cast %25 : vector<4x4x8x256xf32> to vector<4x1x4x8x256xf32>
    tpu.vector_store %arg5[%c0_23, %c1, %c0_24, %c0_25, %c0_26], %28 {strides = array<i32>} : memref<4x2x4x16x256xf32, #tpu.memory_space<vmem>>, vector<4x1x4x8x256xf32>,
    %c0_27 = arith.constant 0 : index
    %c768 = arith.constant 768 : index
    %29 = vector.load %arg3[%c0_27, %c768] : memref<4x1024xf32, #tpu.memory_space<vmem>>, vector<4x256xf32>
    %cst_28 = arith.constant dense<0.000000e+00> : vector<128x256xf32>
    %30 = tpu.matmul %1, %29, %cst_28 {dimension_numbers = #tpu.dot_dimension_numbers<[1], [0], [0], [1], [0, 0, 1, 1], [], []>} : vector<128x4xf32>, vector<4x256xf32>, vector<128x256xf32> -> vector<128x256xf32>
    %c0_29 = arith.constant 0 : index
    %c768_30 = arith.constant 768 : index
    %31 = vector.load %arg4[%c0_29, %c768_30] : memref<1x1024xf32, #tpu.memory_space<vmem>>, vector<1x256xf32>
    %32 = vector.broadcast %31 : vector<1x256xf32> to vector<128x256xf32>
    %33 = arith.addf %30, %32 : vector<128x256xf32>
    %34 = vector.shape_cast %33 : vector<128x256xf32> to vector<4x4x8x256xf32>
    %c0_31 = arith.constant 0 : index
    %c1_32 = arith.constant 1 : index
    %c0_33 = arith.constant 0 : index
    %c8_34 = arith.constant 8 : index
    %c0_35 = arith.constant 0 : index
    %35 = vector.load %arg5[%c0_31, %c1_32, %c0_33, %c8_34, %c0_35] : memref<4x2x4x16x256xf32, #tpu.memory_space<vmem>>, vector<4x1x4x8x256xf32>
    %36 = vector.shape_cast %35 : vector<4x1x4x8x256xf32> to vector<4x4x8x256xf32>
    %37 = vector.shape_cast %34 : vector<4x4x8x256xf32> to vector<4x1x4x8x256xf32>
    tpu.vector_store %arg5[%c0_31, %c1_32, %c0_33, %c8_34, %c0_35], %37 {strides = array<i32>} : memref<4x2x4x16x256xf32, #tpu.memory_space<vmem>>, vector<4x1x4x8x256xf32>,
    return
  }
  func.func @transform_0(%arg0: i32, %arg1: i32) -> (i32, i32, i32) {
    %c0_i32 = arith.constant 0 : i32
    %c0_i32_0 = arith.constant 0 : i32
    return %arg0, %arg1, %c0_i32 : i32, i32, i32
  }
  func.func @transform_1(%arg0: i32, %arg1: i32) -> (i32, i32) {
    %c0_i32 = arith.constant 0 : i32
    %c0_i32_0 = arith.constant 0 : i32
    %c0_i32_1 = arith.constant 0 : i32
    return %c0_i32, %c0_i32_0 : i32, i32
  }
  func.func @transform_2(%arg0: i32, %arg1: i32) -> (i32, i32) {
    %c0_i32 = arith.constant 0 : i32
    %c0_i32_0 = arith.constant 0 : i32
    %c0_i32_1 = arith.constant 0 : i32
    return %c0_i32, %c0_i32_0 : i32, i32
  }
  func.func @transform_3(%arg0: i32, %arg1: i32) -> (i32, i32, i32, i32, i32) {
    %c0_i32 = arith.constant 0 : i32
    %c0_i32_0 = arith.constant 0 : i32
    %c0_i32_1 = arith.constant 0 : i32
    %c0_i32_2 = arith.constant 0 : i32
    return %arg0, %c0_i32, %arg1, %c0_i32_0, %c0_i32_1 : i32, i32, i32, i32, i32
  }
}

</mosaic_0001>

<llo_original>
// kernel: tpu_custom_call.1
$region0: #{tpu_custom_call.1}
  #allocation0 [shape = 'u32[]', space=smem, size = 0x4, offset = 0x4, fixed_abs, tag = 'smem constant byte address 0x4 - core index']
  #allocation1 [shape = 'u32[144,128]{1,0:T(1,128)}', space=vmem, size = 0x12000, scoped, tag = 'internal scratch']
  %s0 = inlined_call_operand.vmem [shape: f32[8,32,4], index: 0, kind: input, shape index: {}]
  %s1 = inlined_call_operand.vmem [shape: f32[4,1024], index: 1, kind: input, shape index: {}]
  %s2 = inlined_call_operand.vmem [shape: f32[1,1024], index: 2, kind: input, shape index: {}]
  %s3 = inlined_call_operand.hbm [shape: f32[8,2,4,16,256], index: 3, kind: output, shape index: {}]
  %s4 = sld [smem:[#allocation0]]
  $region45: #{tpu_custom_call.1} parent=0
    _
  %s6 = ssub.s32 1, %s4
  %s7 = scalar_select 0, %s6, %s4
  $region1: #{tpu_custom_call.1} parent=0
    #allocation2 [shape = 'u8[1048576]{0}', space=vmem, size = 0x100000, scoped, tag = 'output window, operand 0']
    #allocation3 [shape = 's32[2]{0}', space=sflag, size = 0x8, scoped, tag = 'scoped memory for tpu_custom_call.1']
    %8 = vsyncpa [#allocation3], 0
    %s9 = scalar_lea.sflag [#allocation3], 1
    %10 = vsyncpa %s9, 0
    loop: start=0, step=1, limit=4
    $region2: #{tpu_custom_call.1} parent=1 // loop_pre_header
      _
    $region3: #{tpu_custom_call.1} parent=1 // loop_header
      %s12 = sphi 0, %s16
      %p13 = scmp.ge.s32.totalorder %s12, 4
      %s19 = sphi 0, %s31
      %s20 = sphi 0, %s27
      %s21 = sphi 0, %s19
      %s22 = sphi 0, %s20
      %s23 = sphi 0, %s21
      %s24 = sphi 0, %s22
      %s36 = sphi 0, %s38
      %s39 = sphi 0, %s36
      %s40 = sphi 0, %s39
      %s56 = sphi 0, %s40
      %s60 = sphi 0, %s60
      %s62 = sphi 0, %s60
      %s63 = sphi 0, %s62
      %s77 = sphi 0, %s63
      %s81 = sphi 0, %s81
      %s83 = sphi 0, %s81
      %s84 = sphi 0, %s83
      %s98 = sphi 0, %s84
      %s106 = sphi 0, %s108
      %s109 = sphi 0, %s106
      %s110 = sphi 0, %s109
      %s126 = sphi 0, %s110
    $region4: #{tpu_custom_call.1} parent=1 // loop_header_branch
      %15 = sbr.rel (%p13) target = $region8
    $region5: #{tpu_custom_call.1} parent=1 // loop_body
      %s17 = ssub.s32 %s12, 1
      %s18 = ssub.s32 %s12, 2
      %s25 = sadd.s32 1, %s20
      %p26 = scmp.ge.s32.totalorder %s25, 1
      %s27 = scalar_select %p26, 0, %s25
      %s28 = sadd.s32 1, %s19
      %s29 = scalar_select %p26, %s28, %s19
      %p30 = scmp.ge.s32.totalorder %s29, 2
      %s31 = scalar_select %p30, 0, %s29
      %s32 = ssub.s32 %s19, %s31
      %s33 = ssub.s32 %s20, %s27
      %s34 = sor.u32 %s32, %s33
      %p35 = scmp.eq.s32.totalorder %s34, 0
      %s37 = sadd.s32 %s36, 1
      %s38 = scalar_select %p35, %s36, %s37
      %p41 = pneg %p35
      %p42 = scmp.eq.s32.totalorder %s12, 1
      %p43 = por %p41, %p42
      %p44 = scmp.ne.s32.totalorder %s36, %s39
      %p45 = scmp.eq.s32.totalorder %s12, 0
      %p46 = por %p44, %p45
      %p47 = scmp.ne.s32.totalorder %s36, %s39
      %p48 = scmp.eq.s32.totalorder %s17, 1
      %p49 = por %p47, %p48
      %p50 = scmp.ne.s32.totalorder %s39, %s40
      %p51 = scmp.eq.s32.totalorder %s17, 0
      %p52 = por %p50, %p51
      %p53 = scmp.ne.s32.totalorder %s39, %s40
      %p54 = scmp.eq.s32.totalorder %s18, 1
      %p55 = por %p53, %p54
      %p57 = scmp.ne.s32.totalorder %s40, %s56
      %p58 = scmp.eq.s32.totalorder %s18, 0
      %p59 = por %p57, %p58
      %s61 = sadd.s32 %s60, 1
      %p64 = scmp.eq.s32.totalorder %s12, 1
      %p65 = scmp.ne.s32.totalorder %s60, %s62
      %p66 = scmp.eq.s32.totalorder %s12, 0
      %p67 = por %p65, %p66
      %p68 = scmp.ne.s32.totalorder %s60, %s62
      %p69 = scmp.eq.s32.totalorder %s17, 1
      %p70 = por %p68, %p69
      %p71 = scmp.ne.s32.totalorder %s62, %s63
      %p72 = scmp.eq.s32.totalorder %s17, 0
      %p73 = por %p71, %p72
      %p74 = scmp.ne.s32.totalorder %s62, %s63
      %p75 = scmp.eq.s32.totalorder %s18, 1
      %p76 = por %p74, %p75
      %p78 = scmp.ne.s32.totalorder %s63, %s77
      %p79 = scmp.eq.s32.totalorder %s18, 0
      %p80 = por %p78, %p79
      %s82 = sadd.s32 %s81, 1
      %p85 = scmp.eq.s32.totalorder %s12, 1
      %p86 = scmp.ne.s32.totalorder %s81, %s83
      %p87 = scmp.eq.s32.totalorder %s12, 0
      %p88 = por %p86, %p87
      %p89 = scmp.ne.s32.totalorder %s81, %s83
      %p90 = scmp.eq.s32.totalorder %s17, 1
      %p91 = por %p89, %p90
      %p92 = scmp.ne.s32.totalorder %s83, %s84
      %p93 = scmp.eq.s32.totalorder %s17, 0
      %p94 = por %p92, %p93
      %p95 = scmp.ne.s32.totalorder %s83, %s84
      %p96 = scmp.eq.s32.totalorder %s18, 1
      %p97 = por %p95, %p96
      %p99 = scmp.ne.s32.totalorder %s84, %s98
      %p100 = scmp.eq.s32.totalorder %s18, 0
      %p101 = por %p99, %p100
      %s102 = ssub.s32 %s19, %s31
      %s103 = ssub.s32 %s20, %s27
      %s104 = sor.u32 %s102, %s103
      %p105 = scmp.eq.s32.totalorder %s104, 0
      %s107 = sadd.s32 %s106, 1
      %s108 = scalar_select %p105, %s106, %s107
      %p111 = pneg %p105
      %p112 = scmp.eq.s32.totalorder %s12, 1
      %p113 = por %p111, %p112
      %p114 = scmp.ne.s32.totalorder %s106, %s109
      %p115 = scmp.eq.s32.totalorder %s12, 0
      %p116 = por %p114, %p115
      %p117 = scmp.ne.s32.totalorder %s106, %s109
      %p118 = scmp.eq.s32.totalorder %s17, 1
      %p119 = por %p117, %p118
      %p120 = scmp.ne.s32.totalorder %s109, %s110
      %p121 = scmp.eq.s32.totalorder %s17, 0
      %p122 = por %p120, %p121
      %p123 = scmp.ne.s32.totalorder %s109, %s110
      %p124 = scmp.eq.s32.totalorder %s18, 1
      %p125 = por %p123, %p124
      %p127 = scmp.ne.s32.totalorder %s110, %s126
      %p128 = scmp.eq.s32.totalorder %s18, 0
      %p129 = por %p127, %p128
      %p130 = scmp.le.s32.totalorder 1, %s12
      %p131 = scmp.lt.s32.totalorder %s12, 3
      %p132 = pnand %p130, %p131
      %p133 = pneg %p132
      // Predicated region
      $region9: #{tpu_custom_call.1} parent=5 // pred_check
        _
      $region10: #{tpu_custom_call.1} parent=5 // pred_check_branch
        %135 = sbr.rel (%p132) target = $region12
      $region11: #{tpu_custom_call.1} parent=5 // pred_region
        %s136 = ssub.s32 %s12, 1
        // Predicated region
        $region13: #{tpu_custom_call.1} parent=11 // pred_check
          %p137 = pneg %p73
        $region14: #{tpu_custom_call.1} parent=11 // pred_check_branch
          %139 = sbr.rel (%p137) target = $region16
        $region15: #{tpu_custom_call.1} parent=11 // pred_region
          _
        $region16: #{tpu_custom_call.1} parent=11 // pred_fallthru
          _
        // Predicated region
        $region17: #{tpu_custom_call.1} parent=11 // pred_check
          %p140 = pneg %p94
        $region18: #{tpu_custom_call.1} parent=11 // pred_check_branch
          %142 = sbr.rel (%p140) target = $region20
        $region19: #{tpu_custom_call.1} parent=11 // pred_region
          _
        $region20: #{tpu_custom_call.1} parent=11 // pred_fallthru
          _
      $region12: #{tpu_custom_call.1} parent=5 // pred_fallthru
        _
      %p143 = scmp.lt.s32.totalorder %s12, 2
      // Predicated region
      $region21: #{tpu_custom_call.1} parent=5 // pred_check
        %p144 = pneg %p143
      $region22: #{tpu_custom_call.1} parent=5 // pred_check_branch
        %146 = sbr.rel (%p144) target = $region24
      $region23: #{tpu_custom_call.1} parent=5 // pred_region
        // Predicated region
        $region25: #{tpu_custom_call.1} parent=23 // pred_check
          %p147 = pneg %p46
        $region26: #{tpu_custom_call.1} parent=23 // pred_check_branch
          %149 = sbr.rel (%p147) target = $region28
        $region27: #{tpu_custom_call.1} parent=23 // pred_region
          %s150 = smul.u32 4, %s19
          %s151 = smul.u32 4, %s20
          %p152 = scmp.lt.s32.totalorder %s150, 7
          %s153 = scalar_select %p152, %s150, 7
          %p154 = scmp.lt.s32.totalorder %s151, 3
          %s155 = scalar_select %p154, %s151, 3
          %s156 = smul.addr %s153, 4
          %s157 = sadd.s32 %s155, %s156
          %s158 = smul.addr %s157, 8
          %s159 = scalar_lea.vmem %s0, %s158
          %s160 = smul.u32 4, %s19
          %s161 = smul.u32 4, %s20
        $region28: #{tpu_custom_call.1} parent=23 // pred_fallthru
          _
      $region24: #{tpu_custom_call.1} parent=5 // pred_fallthru
        _
      %p162 = scmp.le.s32.totalorder 1, %s12
      %p163 = scmp.lt.s32.totalorder %s12, 3
      %p164 = pnand %p162, %p163
      %p165 = pneg %p164
      // Predicated region
      $region29: #{tpu_custom_call.1} parent=5 // pred_check
        _
      $region30: #{tpu_custom_call.1} parent=5 // pred_check_branch
        %167 = sbr.rel (%p164) target = $region32
      $region31: #{tpu_custom_call.1} parent=5 // pred_region
        %s168 = ssub.s32 %s12, 1
        %s169 = smul.u32 4, %s21
        %s170 = smul.u32 4, %s22
        %p171 = scmp.lt.s32.totalorder %s169, 7
        %s172 = scalar_select %p171, %s169, 7
        %p173 = scmp.lt.s32.totalorder %s170, 3
        %s174 = scalar_select %p173, %s170, 3
        %s175 = smul.addr %s172, 4
        %s176 = sadd.s32 %s174, %s175
        %s177 = smul.addr %s176, 8
        %s178 = scalar_lea.vmem %s0, %s177
        %p179 = pneg %p52
        %p180 = pneg %p49
        %p181 = pneg %p73
        %p182 = pneg %p70
        %p183 = pneg %p94
        %p184 = pneg %p91
        %p185 = pneg %p122
        %p186 = pneg %p119
        %s187 = sand.u32 %s109, 1
        %s188 = scalar_lea.sflag [#allocation3], %s187
        %s189 = sand.u32 %s109, 1
        %s190 = smul.addr %s189, 1024
        %s191 = scalar_lea.vmem [#allocation2], %s190
        %s192 = smul.u32 4, %s21
        %s193 = smul.u32 4, %s22
        %p194 = scmp.lt.s32.totalorder %s192, 7
        %s195 = scalar_select %p194, %s192, 7
        %p196 = scmp.lt.s32.totalorder %s193, 3
        %s197 = scalar_select %p196, %s193, 3
        %s198 = smul.addr %s195, 4
        %s199 = sadd.s32 %s197, %s198
        %s200 = smul.addr %s199, 8
        %s201 = scalar_lea.vmem %s0, %s200
        %s202 = smul.u32 4, %s21
        %s203 = smul.u32 4, %s22
        %s204 = smul.u32 4, %s21
        %s205 = smul.u32 4, %s22
        %v206 = vld [vmem:[%s201] sm:$0xff]
        %v207 = vld [vmem:[%s201 + $0x8] sm:$0xff]
        %v208 = vld [vmem:[%s201 + $0x10] sm:$0xff]
        %v209 = vld [vmem:[%s201 + $0x18] sm:$0xff]
        %v210 = vld [vmem:[%s201 + $0x20] sm:$0xff]
        %v211 = vld [vmem:[%s201 + $0x28] sm:$0xff]
        %v212 = vld [vmem:[%s201 + $0x30] sm:$0xff]
        %v213 = vld [vmem:[%s201 + $0x38] sm:$0xff]
        %v214 = vld [vmem:[%s201 + $0x40] sm:$0xff]
        %v215 = vld [vmem:[%s201 + $0x48] sm:$0xff]
        %v216 = vld [vmem:[%s201 + $0x50] sm:$0xff]
        %v217 = vld [vmem:[%s201 + $0x58] sm:$0xff]
        %v218 = vld [vmem:[%s201 + $0x60] sm:$0xff]
        %v219 = vld [vmem:[%s201 + $0x68] sm:$0xff]
        %v220 = vld [vmem:[%s201 + $0x70] sm:$0xff]
        %v221 = vld [vmem:[%s201 + $0x78] sm:$0xff]
        %v222 = vld [vmem:[%s1] sm:$0xff]
        %v223 = vld [vmem:[%s2] sm:$0x3]
        %v225 = vlaneseq
        %v226 = vshrl.u32 %v225, 7
        %v227 = vsub.s32 0, %v226
        %v228 = vrot.slane %v223, %v227
        %v229 = vlaneseq
        %v230 = vshrl.u32 %v229, 7
        %v231 = vsub.s32 1, %v230
        %v232 = vrot.slane %v223, %v231
        %v236 = vcombine.high %v222, %v222
        %vm237 = vcmask 31744
        %v239 = vsel %vm237, %v206, 0
        %v242 = vsel %vm237, %v207, 0
        %v245 = vsel %vm237, %v208, 0
        %v248 = vsel %vm237, %v209, 0
        %v251 = vsel %vm237, %v210, 0
        %v254 = vsel %vm237, %v211, 0
        %v257 = vsel %vm237, %v212, 0
        %v260 = vsel %vm237, %v213, 0
        %v263 = vsel %vm237, %v214, 0
        %v266 = vsel %vm237, %v215, 0
        %v269 = vsel %vm237, %v216, 0
        %v272 = vsel %vm237, %v217, 0
        %v275 = vsel %vm237, %v218, 0
        %v278 = vsel %vm237, %v219, 0
        %v281 = vsel %vm237, %v220, 0
        %v284 = vsel %vm237, %v221, 0
        %vm286 = vcmask 1043456
        %v287 = vsel %vm286, %v222, 0
        %v289 = vsel %vm286, %v236, 0
        %291 = vmatprep.subr.mxu0 %v289
        %292 = vmatpush1.msra.mxu0 %v287
        %293 = vmatprep.subr.mxu0 0.0
        %294 = vmatpush1.msra.mxu0 0.0
        %295 = vmatprep.subr.mxu0 0.0
        %296 = vmatpush1.msra.mxu0 0.0
        %297 = vmatprep.subr.mxu0 0.0
        %298 = vmatpush1.msra.mxu0 0.0
        %299 = vmatprep.subr.mxu0 0.0
        %300 = vmatpush1.msra.mxu0 0.0
        %301 = vmatprep.subr.mxu0 0.0
        %302 = vmatpush1.msra.mxu0 0.0
        %303 = vmatprep.subr.mxu0 0.0
        %304 = vmatpush1.msra.mxu0 0.0
        %305 = vmatprep.subr.mxu0 0.0
        %306 = vmatpush1.msra.mxu0 0.0
        %307 = vmatprep.subr.mxu0 0.0
        %308 = vmatpush1.msra.mxu0 0.0
        %309 = vmatprep.subr.mxu0 0.0
        %310 = vmatpush1.msra.mxu0 0.0
        %311 = vmatprep.subr.mxu0 0.0
        %312 = vmatpush1.msra.mxu0 0.0
        %313 = vmatprep.subr.mxu0 0.0
        %314 = vmatpush1.msra.mxu0 0.0
        %315 = vmatprep.subr.mxu0 0.0
        %316 = vmatpush1.msra.mxu0 0.0
        %317 = vmatprep.subr.mxu0 0.0
        %318 = vmatpush1.msra.mxu0 0.0
        %319 = vmatprep.subr.mxu0 0.0
        %320 = vmatpush1.msra.mxu0 0.0
        %321 = vmatprep.subr.mxu0 0.0
        %322 = vmatpush1.msra.mxu0 0.0
        %323 = vmatprep.subr.mxu0 0.0
        %324 = vmatpush1.msra.mxu0 0.0
        %325 = vmatprep.subr.mxu0 0.0
        %326 = vmatpush1.msra.mxu0 0.0
        %327 = vmatprep.subr.mxu0 0.0
        %328 = vmatpush1.msra.mxu0 0.0
        %329 = vmatprep.subr.mxu0 0.0
        %330 = vmatpush1.msra.mxu0 0.0
        %331 = vmatprep.subr.mxu0 0.0
        %332 = vmatpush1.msra.mxu0 0.0
        %333 = vmatprep.subr.mxu0 0.0
        %334 = vmatpush1.msra.mxu0 0.0
        %335 = vmatprep.subr.mxu0 0.0
        %336 = vmatpush1.msra.mxu0 0.0
        %337 = vmatprep.subr.mxu0 0.0
        %338 = vmatpush1.msra.mxu0 0.0
        %339 = vmatprep.subr.mxu0 0.0
        %340 = vmatpush1.msra.mxu0 0.0
        %341 = vmatprep.subr.mxu0 0.0
        %342 = vmatpush1.msra.mxu0 0.0
        %343 = vmatprep.subr.mxu0 0.0
        %344 = vmatpush1.msra.mxu0 0.0
        %345 = vmatprep.subr.mxu0 0.0
        %346 = vmatpush1.msra.mxu0 0.0
        %347 = vmatprep.subr.mxu0 0.0
        %348 = vmatpush1.msra.mxu0 0.0
        %349 = vmatprep.subr.mxu0 0.0
        %350 = vmatpush1.msra.mxu0 0.0
        %351 = vmatprep.subr.mxu0 0.0
        %352 = vmatpush1.msra.mxu0 0.0
        %353 = vmatprep.subr.mxu0 0.0
        %354 = vmatpush1.msra.mxu0 0.0
        %355 = vmatprep.mubr.f32.mxu0 0.0
        %356 = vmatmul.mubr.f32.gmra.mrb[0].mxu0 %v239
        %v357 = vpop.f32.mrb[0].mxu0
        %v358 = vadd.f32 %v228, %v357
        %v359 = vpop.f32.mrb[0].mxu0
        %v360 = vadd.f32 %v232, %v359
        %361 = vmatprep.mubr.f32.mxu0 0.0
        %362 = vmatmul.mubr.f32.gmra.mrb[0].mxu0 %v242
        %v363 = vpop.f32.mrb[0].mxu0
        %v364 = vadd.f32 %v228, %v363
        %v365 = vpop.f32.mrb[0].mxu0
        %v366 = vadd.f32 %v232, %v365
        %367 = vmatprep.mubr.f32.mxu0 0.0
        %368 = vmatmul.mubr.f32.gmra.mrb[0].mxu0 %v245
        %v369 = vpop.f32.mrb[0].mxu0
        %v370 = vadd.f32 %v228, %v369
        %v371 = vpop.f32.mrb[0].mxu0
        %v372 = vadd.f32 %v232, %v371
        %373 = vmatprep.mubr.f32.mxu0 0.0
        %374 = vmatmul.mubr.f32.gmra.mrb[0].mxu0 %v248
        %v375 = vpop.f32.mrb[0].mxu0
        %v376 = vadd.f32 %v228, %v375
        %v377 = vpop.f32.mrb[0].mxu0
        %v378 = vadd.f32 %v232, %v377
        %379 = vmatprep.mubr.f32.mxu0 0.0
        %380 = vmatmul.mubr.f32.gmra.mrb[0].mxu0 %v251
        %v381 = vpop.f32.mrb[0].mxu0
        %v382 = vadd.f32 %v228, %v381
        %v383 = vpop.f32.mrb[0].mxu0
        %v384 = vadd.f32 %v232, %v383
        %385 = vmatprep.mubr.f32.mxu0 0.0
        %386 = vmatmul.mubr.f32.gmra.mrb[0].mxu0 %v254
        %v387 = vpop.f32.mrb[0].mxu0
        %v388 = vadd.f32 %v228, %v387
        %v389 = vpop.f32.mrb[0].mxu0
        %v390 = vadd.f32 %v232, %v389
        %391 = vmatprep.mubr.f32.mxu0 0.0
        %392 = vmatmul.mubr.f32.gmra.mrb[0].mxu0 %v257
        %v393 = vpop.f32.mrb[0].mxu0
        %v394 = vadd.f32 %v228, %v393
        %v395 = vpop.f32.mrb[0].mxu0
        %v396 = vadd.f32 %v232, %v395
        %397 = vmatprep.mubr.f32.mxu0 0.0
        %398 = vmatmul.mubr.f32.gmra.mrb[0].mxu0 %v260
        %v399 = vpop.f32.mrb[0].mxu0
        %v400 = vadd.f32 %v228, %v399
        %v401 = vpop.f32.mrb[0].mxu0
        %v402 = vadd.f32 %v232, %v401
        %403 = vmatprep.mubr.f32.mxu0 0.0
        %404 = vmatmul.mubr.f32.gmra.mrb[0].mxu0 %v263
        %v405 = vpop.f32.mrb[0].mxu0
        %v406 = vadd.f32 %v228, %v405
        %v407 = vpop.f32.mrb[0].mxu0
        %v408 = vadd.f32 %v232, %v407
        %409 = vmatprep.mubr.f32.mxu0 0.0
        %410 = vmatmul.mubr.f32.gmra.mrb[0].mxu0 %v266
        %v411 = vpop.f32.mrb[0].mxu0
        %v412 = vadd.f32 %v228, %v411
        %v413 = vpop.f32.mrb[0].mxu0
        %v414 = vadd.f32 %v232, %v413
        %415 = vmatprep.mubr.f32.mxu0 0.0
        %416 = vmatmul.mubr.f32.gmra.mrb[0].mxu0 %v269
        %v417 = vpop.f32.mrb[0].mxu0
        %v418 = vadd.f32 %v228, %v417
        %v419 = vpop.f32.mrb[0].mxu0
        %v420 = vadd.f32 %v232, %v419
        %421 = vmatprep.mubr.f32.mxu0 0.0
        %422 = vmatmul.mubr.f32.gmra.mrb[0].mxu0 %v272
        %v423 = vpop.f32.mrb[0].mxu0
        %v424 = vadd.f32 %v228, %v423
        %v425 = vpop.f32.mrb[0].mxu0
        %v426 = vadd.f32 %v232, %v425
        %427 = vmatprep.mubr.f32.mxu0 0.0
        %428 = vmatmul.mubr.f32.gmra.mrb[0].mxu0 %v275
        %v429 = vpop.f32.mrb[0].mxu0
        %v430 = vadd.f32 %v228, %v429
        %v431 = vpop.f32.mrb[0].mxu0
        %v432 = vadd.f32 %v232, %v431
        %433 = vmatprep.mubr.f32.mxu0 0.0
        %434 = vmatmul.mubr.f32.gmra.mrb[0].mxu0 %v278
        %v435 = vpop.f32.mrb[0].mxu0
        %v436 = vadd.f32 %v228, %v435
        %v437 = vpop.f32.mrb[0].mxu0
        %v438 = vadd.f32 %v232, %v437
        %439 = vmatprep.mubr.f32.mxu0 0.0
        %440 = vmatmul.mubr.f32.gmra.mrb[0].mxu0 %v281
        %v441 = vpop.f32.mrb[0].mxu0
        %v442 = vadd.f32 %v228, %v441
        %v443 = vpop.f32.mrb[0].mxu0
        %v444 = vadd.f32 %v232, %v443
        %445 = vmatprep.mubr.f32.mxu0 0.0
        %446 = vmatmul.mubr.f32.gmra.mrb[0].mxu0 %v284
        %v447 = vpop.f32.mrb[0].mxu0
        %v448 = vadd.f32 %v228, %v447
        %v449 = vpop.f32.mrb[0].mxu0
        %v450 = vadd.f32 %v232, %v449
        %451 = vdwg.mxu0
        %452 = vst [vmem:[%s191] sm:$0xff] %v358
        %453 = vst [vmem:[%s191 + $0x8] sm:$0xff] %v360
        %454 = vst [vmem:[%s191 + $0x20] sm:$0xff] %v364
        %455 = vst [vmem:[%s191 + $0x28] sm:$0xff] %v366
        %456 = vst [vmem:[%s191 + $0x40] sm:$0xff] %v370
        %457 = vst [vmem:[%s191 + $0x48] sm:$0xff] %v372
        %458 = vst [vmem:[%s191 + $0x60] sm:$0xff] %v376
        %459 = vst [vmem:[%s191 + $0x68] sm:$0xff] %v378
        %460 = vst [vmem:[%s191 + $0x100] sm:$0xff] %v382
        %461 = vst [vmem:[%s191 + $0x108] sm:$0xff] %v384
        %462 = vst [vmem:[%s191 + $0x120] sm:$0xff] %v388
        %463 = vst [vmem:[%s191 + $0x128] sm:$0xff] %v390
        %464 = vst [vmem:[%s191 + $0x140] sm:$0xff] %v394
        %465 = vst [vmem:[%s191 + $0x148] sm:$0xff] %v396
        %466 = vst [vmem:[%s191 + $0x160] sm:$0xff] %v400
        %467 = vst [vmem:[%s191 + $0x168] sm:$0xff] %v402
        %468 = vst [vmem:[%s191 + $0x200] sm:$0xff] %v406
        %469 = vst [vmem:[%s191 + $0x208] sm:$0xff] %v408
        %470 = vst [vmem:[%s191 + $0x220] sm:$0xff] %v412
        %471 = vst [vmem:[%s191 + $0x228] sm:$0xff] %v414
        %472 = vst [vmem:[%s191 + $0x240] sm:$0xff] %v418
        %473 = vst [vmem:[%s191 + $0x248] sm:$0xff] %v420
        %474 = vst [vmem:[%s191 + $0x260] sm:$0xff] %v424
        %475 = vst [vmem:[%s191 + $0x268] sm:$0xff] %v426
        %476 = vst [vmem:[%s191 + $0x300] sm:$0xff] %v430
        %477 = vst [vmem:[%s191 + $0x308] sm:$0xff] %v432
        %478 = vst [vmem:[%s191 + $0x320] sm:$0xff] %v436
        %479 = vst [vmem:[%s191 + $0x328] sm:$0xff] %v438
        %480 = vst [vmem:[%s191 + $0x340] sm:$0xff] %v442
        %481 = vst [vmem:[%s191 + $0x348] sm:$0xff] %v444
        %482 = vst [vmem:[%s191 + $0x360] sm:$0xff] %v448
        %483 = vst [vmem:[%s191 + $0x368] sm:$0xff] %v450
        %v484 = vld [vmem:[%s1 + $0x8] sm:$0xff]
        %v485 = vld [vmem:[%s2 + $0x2] sm:$0x3]
        %v487 = vlaneseq
        %v488 = vshrl.u32 %v487, 7
        %v489 = vsub.s32 0, %v488
        %v490 = vrot.slane %v485, %v489
        %v491 = vlaneseq
        %v492 = vshrl.u32 %v491, 7
        %v493 = vsub.s32 1, %v492
        %v494 = vrot.slane %v485, %v493
        %v498 = vcombine.high %v484, %v484
        %v499 = vsel %vm286, %v484, 0
        %v501 = vsel %vm286, %v498, 0
        %503 = vmatprep.subr.mxu0 %v501
        %504 = vmatpush1.msra.mxu0 %v499
        %505 = vmatprep.subr.mxu0 0.0
        %506 = vmatpush1.msra.mxu0 0.0
        %507 = vmatprep.subr.mxu0 0.0
        %508 = vmatpush1.msra.mxu0 0.0
        %509 = vmatprep.subr.mxu0 0.0
        %510 = vmatpush1.msra.mxu0 0.0
        %511 = vmatprep.subr.mxu0 0.0
        %512 = vmatpush1.msra.mxu0 0.0
        %513 = vmatprep.subr.mxu0 0.0
        %514 = vmatpush1.msra.mxu0 0.0
        %515 = vmatprep.subr.mxu0 0.0
        %516 = vmatpush1.msra.mxu0 0.0
        %517 = vmatprep.subr.mxu0 0.0
        %518 = vmatpush1.msra.mxu0 0.0
        %519 = vmatprep.subr.mxu0 0.0
        %520 = vmatpush1.msra.mxu0 0.0
        %521 = vmatprep.subr.mxu0 0.0
        %522 = vmatpush1.msra.mxu0 0.0
        %523 = vmatprep.subr.mxu0 0.0
        %524 = vmatpush1.msra.mxu0 0.0
        %525 = vmatprep.subr.mxu0 0.0
        %526 = vmatpush1.msra.mxu0 0.0
        %527 = vmatprep.subr.mxu0 0.0
        %528 = vmatpush1.msra.mxu0 0.0
        %529 = vmatprep.subr.mxu0 0.0
        %530 = vmatpush1.msra.mxu0 0.0
        %531 = vmatprep.subr.mxu0 0.0
        %532 = vmatpush1.msra.mxu0 0.0
        %533 = vmatprep.subr.mxu0 0.0
        %534 = vmatpush1.msra.mxu0 0.0
        %535 = vmatprep.subr.mxu0 0.0
        %536 = vmatpush1.msra.mxu0 0.0
        %537 = vmatprep.subr.mxu0 0.0
        %538 = vmatpush1.msra.mxu0 0.0
        %539 = vmatprep.subr.mxu0 0.0
        %540 = vmatpush1.msra.mxu0 0.0
        %541 = vmatprep.subr.mxu0 0.0
        %542 = vmatpush1.msra.mxu0 0.0
        %543 = vmatprep.subr.mxu0 0.0
        %544 = vmatpush1.msra.mxu0 0.0
        %545 = vmatprep.subr.mxu0 0.0
        %546 = vmatpush1.msra.mxu0 0.0
        %547 = vmatprep.subr.mxu0 0.0
        %548 = vmatpush1.msra.mxu0 0.0
        %549 = vmatprep.subr.mxu0 0.0
        %550 = vmatpush1.msra.mxu0 0.0
        %551 = vmatprep.subr.mxu0 0.0
        %552 = vmatpush1.msra.mxu0 0.0
        %553 = vmatprep.subr.mxu0 0.0
        %554 = vmatpush1.msra.mxu0 0.0
        %555 = vmatprep.subr.mxu0 0.0
        %556 = vmatpush1.msra.mxu0 0.0
        %557 = vmatprep.subr.mxu0 0.0
        %558 = vmatpush1.msra.mxu0 0.0
        %559 = vmatprep.subr.mxu0 0.0
        %560 = vmatpush1.msra.mxu0 0.0
        %561 = vmatprep.subr.mxu0 0.0
        %562 = vmatpush1.msra.mxu0 0.0
        %563 = vmatprep.subr.mxu0 0.0
        %564 = vmatpush1.msra.mxu0 0.0
        %565 = vmatprep.subr.mxu0 0.0
        %566 = vmatpush1.msra.mxu0 0.0
        %567 = vmatprep.mubr.f32.mxu0 0.0
        %568 = vmatmul.mubr.f32.gmra.mrb[0].mxu0 %v239
        %v569 = vpop.f32.mrb[0].mxu0
        %v570 = vadd.f32 %v490, %v569
        %v571 = vpop.f32.mrb[0].mxu0
        %v572 = vadd.f32 %v494, %v571
        %573 = vmatprep.mubr.f32.mxu0 0.0
        %574 = vmatmul.mubr.f32.gmra.mrb[0].mxu0 %v242
        %v575 = vpop.f32.mrb[0].mxu0
        %v576 = vadd.f32 %v490, %v575
        %v577 = vpop.f32.mrb[0].mxu0
        %v578 = vadd.f32 %v494, %v577
        %579 = vmatprep.mubr.f32.mxu0 0.0
        %580 = vmatmul.mubr.f32.gmra.mrb[0].mxu0 %v245
        %v581 = vpop.f32.mrb[0].mxu0
        %v582 = vadd.f32 %v490, %v581
        %v583 = vpop.f32.mrb[0].mxu0
        %v584 = vadd.f32 %v494, %v583
        %585 = vmatprep.mubr.f32.mxu0 0.0
        %586 = vmatmul.mubr.f32.gmra.mrb[0].mxu0 %v248
        %v587 = vpop.f32.mrb[0].mxu0
        %v588 = vadd.f32 %v490, %v587
        %v589 = vpop.f32.mrb[0].mxu0
        %v590 = vadd.f32 %v494, %v589
        %591 = vmatprep.mubr.f32.mxu0 0.0
        %592 = vmatmul.mubr.f32.gmra.mrb[0].mxu0 %v251
        %v593 = vpop.f32.mrb[0].mxu0
        %v594 = vadd.f32 %v490, %v593
        %v595 = vpop.f32.mrb[0].mxu0
        %v596 = vadd.f32 %v494, %v595
        %597 = vmatprep.mubr.f32.mxu0 0.0
        %598 = vmatmul.mubr.f32.gmra.mrb[0].mxu0 %v254
        %v599 = vpop.f32.mrb[0].mxu0
        %v600 = vadd.f32 %v490, %v599
        %v601 = vpop.f32.mrb[0].mxu0
        %v602 = vadd.f32 %v494, %v601
        %603 = vmatprep.mubr.f32.mxu0 0.0
        %604 = vmatmul.mubr.f32.gmra.mrb[0].mxu0 %v257
        %v605 = vpop.f32.mrb[0].mxu0
        %v606 = vadd.f32 %v490, %v605
        %v607 = vpop.f32.mrb[0].mxu0
        %v608 = vadd.f32 %v494, %v607
        %609 = vmatprep.mubr.f32.mxu0 0.0
        %610 = vmatmul.mubr.f32.gmra.mrb[0].mxu0 %v260
        %v611 = vpop.f32.mrb[0].mxu0
        %v612 = vadd.f32 %v490, %v611
        %v613 = vpop.f32.mrb[0].mxu0
        %v614 = vadd.f32 %v494, %v613
        %615 = vmatprep.mubr.f32.mxu0 0.0
        %616 = vmatmul.mubr.f32.gmra.mrb[0].mxu0 %v263
        %v617 = vpop.f32.mrb[0].mxu0
        %v618 = vadd.f32 %v490, %v617
        %v619 = vpop.f32.mrb[0].mxu0
        %v620 = vadd.f32 %v494, %v619
        %621 = vmatprep.mubr.f32.mxu0 0.0
        %622 = vmatmul.mubr.f32.gmra.mrb[0].mxu0 %v266
        %v623 = vpop.f32.mrb[0].mxu0
        %v624 = vadd.f32 %v490, %v623
        %v625 = vpop.f32.mrb[0].mxu0
        %v626 = vadd.f32 %v494, %v625
        %627 = vmatprep.mubr.f32.mxu0 0.0
        %628 = vmatmul.mubr.f32.gmra.mrb[0].mxu0 %v269
        %v629 = vpop.f32.mrb[0].mxu0
        %v630 = vadd.f32 %v490, %v629
        %v631 = vpop.f32.mrb[0].mxu0
        %v632 = vadd.f32 %v494, %v631
        %633 = vmatprep.mubr.f32.mxu0 0.0
        %634 = vmatmul.mubr.f32.gmra.mrb[0].mxu0 %v272
        %v635 = vpop.f32.mrb[0].mxu0
        %v636 = vadd.f32 %v490, %v635
        %v637 = vpop.f32.mrb[0].mxu0
        %v638 = vadd.f32 %v494, %v637
        %639 = vmatprep.mubr.f32.mxu0 0.0
        %640 = vmatmul.mubr.f32.gmra.mrb[0].mxu0 %v275
        %v641 = vpop.f32.mrb[0].mxu0
        %v642 = vadd.f32 %v490, %v641
        %v643 = vpop.f32.mrb[0].mxu0
        %v644 = vadd.f32 %v494, %v643
        %645 = vmatprep.mubr.f32.mxu0 0.0
        %646 = vmatmul.mubr.f32.gmra.mrb[0].mxu0 %v278
        %v647 = vpop.f32.mrb[0].mxu0
        %v648 = vadd.f32 %v490, %v647
        %v649 = vpop.f32.mrb[0].mxu0
        %v650 = vadd.f32 %v494, %v649
        %651 = vmatprep.mubr.f32.mxu0 0.0
        %652 = vmatmul.mubr.f32.gmra.mrb[0].mxu0 %v281
        %v653 = vpop.f32.mrb[0].mxu0
        %v654 = vadd.f32 %v490, %v653
        %v655 = vpop.f32.mrb[0].mxu0
        %v656 = vadd.f32 %v494, %v655
        %657 = vmatprep.mubr.f32.mxu0 0.0
        %658 = vmatmul.mubr.f32.gmra.mrb[0].mxu0 %v284
        %v659 = vpop.f32.mrb[0].mxu0
        %v660 = vadd.f32 %v490, %v659
        %v661 = vpop.f32.mrb[0].mxu0
        %v662 = vadd.f32 %v494, %v661
        %663 = vdwg.mxu0
        %664 = vst [vmem:[%s191 + $0x10] sm:$0xff] %v570
        %665 = vst [vmem:[%s191 + $0x18] sm:$0xff] %v572
        %666 = vst [vmem:[%s191 + $0x30] sm:$0xff] %v576
        %667 = vst [vmem:[%s191 + $0x38] sm:$0xff] %v578
        %668 = vst [vmem:[%s191 + $0x50] sm:$0xff] %v582
        %669 = vst [vmem:[%s191 + $0x58] sm:$0xff] %v584
        %670 = vst [vmem:[%s191 + $0x70] sm:$0xff] %v588
        %671 = vst [vmem:[%s191 + $0x78] sm:$0xff] %v590
        %672 = vst [vmem:[%s191 + $0x110] sm:$0xff] %v594
        %673 = vst [vmem:[%s191 + $0x118] sm:$0xff] %v596
        %674 = vst [vmem:[%s191 + $0x130] sm:$0xff] %v600
        %675 = vst [vmem:[%s191 + $0x138] sm:$0xff] %v602
        %676 = vst [vmem:[%s191 + $0x150] sm:$0xff] %v606
        %677 = vst [vmem:[%s191 + $0x158] sm:$0xff] %v608
        %678 = vst [vmem:[%s191 + $0x170] sm:$0xff] %v612
        %679 = vst [vmem:[%s191 + $0x178] sm:$0xff] %v614
        %680 = vst [vmem:[%s191 + $0x210] sm:$0xff] %v618
        %681 = vst [vmem:[%s191 + $0x218] sm:$0xff] %v620
        %682 = vst [vmem:[%s191 + $0x230] sm:$0xff] %v624
        %683 = vst [vmem:[%s191 + $0x238] sm:$0xff] %v626
        %684 = vst [vmem:[%s191 + $0x250] sm:$0xff] %v630
        %685 = vst [vmem:[%s191 + $0x258] sm:$0xff] %v632
        %686 = vst [vmem:[%s191 + $0x270] sm:$0xff] %v636
        %687 = vst [vmem:[%s191 + $0x278] sm:$0xff] %v638
        %688 = vst [vmem:[%s191 + $0x310] sm:$0xff] %v642
        %689 = vst [vmem:[%s191 + $0x318] sm:$0xff] %v644
        %690 = vst [vmem:[%s191 + $0x330] sm:$0xff] %v648
        %691 = vst [vmem:[%s191 + $0x338] sm:$0xff] %v650
        %692 = vst [vmem:[%s191 + $0x350] sm:$0xff] %v654
        %693 = vst [vmem:[%s191 + $0x358] sm:$0xff] %v656
        %694 = vst [vmem:[%s191 + $0x370] sm:$0xff] %v660
        %695 = vst [vmem:[%s191 + $0x378] sm:$0xff] %v662
        %v696 = vld [vmem:[%s1 + $0x10] sm:$0xff]
        %v697 = vld [vmem:[%s2 + $0x4] sm:$0x3]
        %v699 = vlaneseq
        %v700 = vshrl.u32 %v699, 7
        %v701 = vsub.s32 0, %v700
        %v702 = vrot.slane %v697, %v701
        %v703 = vlaneseq
        %v704 = vshrl.u32 %v703, 7
        %v705 = vsub.s32 1, %v704
        %v706 = vrot.slane %v697, %v705
        %v710 = vcombine.high %v696, %v696
        %v711 = vsel %vm286, %v696, 0
        %v713 = vsel %vm286, %v710, 0
        %715 = vmatprep.subr.mxu0 %v713
        %716 = vmatpush1.msra.mxu0 %v711
        %717 = vmatprep.subr.mxu0 0.0
        %718 = vmatpush1.msra.mxu0 0.0
        %719 = vmatprep.subr.mxu0 0.0
        %720 = vmatpush1.msra.mxu0 0.0
        %721 = vmatprep.subr.mxu0 0.0
        %722 = vmatpush1.msra.mxu0 0.0
        %723 = vmatprep.subr.mxu0 0.0
        %724 = vmatpush1.msra.mxu0 0.0
        %725 = vmatprep.subr.mxu0 0.0
        %726 = vmatpush1.msra.mxu0 0.0
        %727 = vmatprep.subr.mxu0 0.0
        %728 = vmatpush1.msra.mxu0 0.0
        %729 = vmatprep.subr.mxu0 0.0
        %730 = vmatpush1.msra.mxu0 0.0
        %731 = vmatprep.subr.mxu0 0.0
        %732 = vmatpush1.msra.mxu0 0.0
        %733 = vmatprep.subr.mxu0 0.0
        %734 = vmatpush1.msra.mxu0 0.0
        %735 = vmatprep.subr.mxu0 0.0
        %736 = vmatpush1.msra.mxu0 0.0
        %737 = vmatprep.subr.mxu0 0.0
        %738 = vmatpush1.msra.mxu0 0.0
        %739 = vmatprep.subr.mxu0 0.0
        %740 = vmatpush1.msra.mxu0 0.0
        %741 = vmatprep.subr.mxu0 0.0
        %742 = vmatpush1.msra.mxu0 0.0
        %743 = vmatprep.subr.mxu0 0.0
        %744 = vmatpush1.msra.mxu0 0.0
        %745 = vmatprep.subr.mxu0 0.0
        %746 = vmatpush1.msra.mxu0 0.0
        %747 = vmatprep.subr.mxu0 0.0
        %748 = vmatpush1.msra.mxu0 0.0
        %749 = vmatprep.subr.mxu0 0.0
        %750 = vmatpush1.msra.mxu0 0.0
        %751 = vmatprep.subr.mxu0 0.0
        %752 = vmatpush1.msra.mxu0 0.0
        %753 = vmatprep.subr.mxu0 0.0
        %754 = vmatpush1.msra.mxu0 0.0
        %755 = vmatprep.subr.mxu0 0.0
        %756 = vmatpush1.msra.mxu0 0.0
        %757 = vmatprep.subr.mxu0 0.0
        %758 = vmatpush1.msra.mxu0 0.0
        %759 = vmatprep.subr.mxu0 0.0
        %760 = vmatpush1.msra.mxu0 0.0
        %761 = vmatprep.subr.mxu0 0.0
        %762 = vmatpush1.msra.mxu0 0.0
        %763 = vmatprep.subr.mxu0 0.0
        %764 = vmatpush1.msra.mxu0 0.0
        %765 = vmatprep.subr.mxu0 0.0
        %766 = vmatpush1.msra.mxu0 0.0
        %767 = vmatprep.subr.mxu0 0.0
        %768 = vmatpush1.msra.mxu0 0.0
        %769 = vmatprep.subr.mxu0 0.0
        %770 = vmatpush1.msra.mxu0 0.0
        %771 = vmatprep.subr.mxu0 0.0
        %772 = vmatpush1.msra.mxu0 0.0
        %773 = vmatprep.subr.mxu0 0.0
        %774 = vmatpush1.msra.mxu0 0.0
        %775 = vmatprep.subr.mxu0 0.0
        %776 = vmatpush1.msra.mxu0 0.0
        %777 = vmatprep.subr.mxu0 0.0
        %778 = vmatpush1.msra.mxu0 0.0
        %779 = vmatprep.mubr.f32.mxu0 0.0
        %780 = vmatmul.mubr.f32.gmra.mrb[0].mxu0 %v239
        %v781 = vpop.f32.mrb[0].mxu0
        %v782 = vadd.f32 %v702, %v781
        %v783 = vpop.f32.mrb[0].mxu0
        %v784 = vadd.f32 %v706, %v783
        %785 = vmatprep.mubr.f32.mxu0 0.0
        %786 = vmatmul.mubr.f32.gmra.mrb[0].mxu0 %v242
        %v787 = vpop.f32.mrb[0].mxu0
        %v788 = vadd.f32 %v702, %v787
        %v789 = vpop.f32.mrb[0].mxu0
        %v790 = vadd.f32 %v706, %v789
        %791 = vmatprep.mubr.f32.mxu0 0.0
        %792 = vmatmul.mubr.f32.gmra.mrb[0].mxu0 %v245
        %v793 = vpop.f32.mrb[0].mxu0
        %v794 = vadd.f32 %v702, %v793
        %v795 = vpop.f32.mrb[0].mxu0
        %v796 = vadd.f32 %v706, %v795
        %797 = vmatprep.mubr.f32.mxu0 0.0
        %798 = vmatmul.mubr.f32.gmra.mrb[0].mxu0 %v248
        %v799 = vpop.f32.mrb[0].mxu0
        %v800 = vadd.f32 %v702, %v799
        %v801 = vpop.f32.mrb[0].mxu0
        %v802 = vadd.f32 %v706, %v801
        %803 = vmatprep.mubr.f32.mxu0 0.0
        %804 = vmatmul.mubr.f32.gmra.mrb[0].mxu0 %v251
        %v805 = vpop.f32.mrb[0].mxu0
        %v806 = vadd.f32 %v702, %v805
        %v807 = vpop.f32.mrb[0].mxu0
        %v808 = vadd.f32 %v706, %v807
        %809 = vmatprep.mubr.f32.mxu0 0.0
        %810 = vmatmul.mubr.f32.gmra.mrb[0].mxu0 %v254
        %v811 = vpop.f32.mrb[0].mxu0
        %v812 = vadd.f32 %v702, %v811
        %v813 = vpop.f32.mrb[0].mxu0
        %v814 = vadd.f32 %v706, %v813
        %815 = vmatprep.mubr.f32.mxu0 0.0
        %816 = vmatmul.mubr.f32.gmra.mrb[0].mxu0 %v257
        %v817 = vpop.f32.mrb[0].mxu0
        %v818 = vadd.f32 %v702, %v817
        %v819 = vpop.f32.mrb[0].mxu0
        %v820 = vadd.f32 %v706, %v819
        %821 = vmatprep.mubr.f32.mxu0 0.0
        %822 = vmatmul.mubr.f32.gmra.mrb[0].mxu0 %v260
        %v823 = vpop.f32.mrb[0].mxu0
        %v824 = vadd.f32 %v702, %v823
        %v825 = vpop.f32.mrb[0].mxu0
        %v826 = vadd.f32 %v706, %v825
        %827 = vmatprep.mubr.f32.mxu0 0.0
        %828 = vmatmul.mubr.f32.gmra.mrb[0].mxu0 %v263
        %v829 = vpop.f32.mrb[0].mxu0
        %v830 = vadd.f32 %v702, %v829
        %v831 = vpop.f32.mrb[0].mxu0
        %v832 = vadd.f32 %v706, %v831
        %833 = vmatprep.mubr.f32.mxu0 0.0
        %834 = vmatmul.mubr.f32.gmra.mrb[0].mxu0 %v266
        %v835 = vpop.f32.mrb[0].mxu0
        %v836 = vadd.f32 %v702, %v835
        %v837 = vpop.f32.mrb[0].mxu0
        %v838 = vadd.f32 %v706, %v837
        %839 = vmatprep.mubr.f32.mxu0 0.0
        %840 = vmatmul.mubr.f32.gmra.mrb[0].mxu0 %v269
        %v841 = vpop.f32.mrb[0].mxu0
        %v842 = vadd.f32 %v702, %v841
        %v843 = vpop.f32.mrb[0].mxu0
        %v844 = vadd.f32 %v706, %v843
        %845 = vmatprep.mubr.f32.mxu0 0.0
        %846 = vmatmul.mubr.f32.gmra.mrb[0].mxu0 %v272
        %v847 = vpop.f32.mrb[0].mxu0
        %v848 = vadd.f32 %v702, %v847
        %v849 = vpop.f32.mrb[0].mxu0
        %v850 = vadd.f32 %v706, %v849
        %851 = vmatprep.mubr.f32.mxu0 0.0
        %852 = vmatmul.mubr.f32.gmra.mrb[0].mxu0 %v275
        %v853 = vpop.f32.mrb[0].mxu0
        %v854 = vadd.f32 %v702, %v853
        %v855 = vpop.f32.mrb[0].mxu0
        %v856 = vadd.f32 %v706, %v855
        %857 = vmatprep.mubr.f32.mxu0 0.0
        %858 = vmatmul.mubr.f32.gmra.mrb[0].mxu0 %v278
        %v859 = vpop.f32.mrb[0].mxu0
        %v860 = vadd.f32 %v702, %v859
        %v861 = vpop.f32.mrb[0].mxu0
        %v862 = vadd.f32 %v706, %v861
        %863 = vmatprep.mubr.f32.mxu0 0.0
        %864 = vmatmul.mubr.f32.gmra.mrb[0].mxu0 %v281
        %v865 = vpop.f32.mrb[0].mxu0
        %v866 = vadd.f32 %v702, %v865
        %v867 = vpop.f32.mrb[0].mxu0
        %v868 = vadd.f32 %v706, %v867
        %869 = vmatprep.mubr.f32.mxu0 0.0
        %870 = vmatmul.mubr.f32.gmra.mrb[0].mxu0 %v284
        %v871 = vpop.f32.mrb[0].mxu0
        %v872 = vadd.f32 %v702, %v871
        %v873 = vpop.f32.mrb[0].mxu0
        %v874 = vadd.f32 %v706, %v873
        %875 = vdwg.mxu0
        %s876 = scalar_lea.vmem %s191, 128 [#allocation2]
        %877 = vst [vmem:[%s876] sm:$0xff] %v782
        %878 = vst [vmem:[%s876 + $0x8] sm:$0xff] %v784
        %879 = vst [vmem:[%s876 + $0x20] sm:$0xff] %v788
        %880 = vst [vmem:[%s876 + $0x28] sm:$0xff] %v790
        %881 = vst [vmem:[%s876 + $0x40] sm:$0xff] %v794
        %882 = vst [vmem:[%s876 + $0x48] sm:$0xff] %v796
        %883 = vst [vmem:[%s876 + $0x60] sm:$0xff] %v800
        %884 = vst [vmem:[%s876 + $0x68] sm:$0xff] %v802
        %885 = vst [vmem:[%s876 + $0x100] sm:$0xff] %v806
        %886 = vst [vmem:[%s876 + $0x108] sm:$0xff] %v808
        %887 = vst [vmem:[%s876 + $0x120] sm:$0xff] %v812
        %888 = vst [vmem:[%s876 + $0x128] sm:$0xff] %v814
        %889 = vst [vmem:[%s876 + $0x140] sm:$0xff] %v818
        %890 = vst [vmem:[%s876 + $0x148] sm:$0xff] %v820
        %891 = vst [vmem:[%s876 + $0x160] sm:$0xff] %v824
        %892 = vst [vmem:[%s876 + $0x168] sm:$0xff] %v826
        %893 = vst [vmem:[%s876 + $0x200] sm:$0xff] %v830
        %894 = vst [vmem:[%s876 + $0x208] sm:$0xff] %v832
        %895 = vst [vmem:[%s876 + $0x220] sm:$0xff] %v836
        %896 = vst [vmem:[%s876 + $0x228] sm:$0xff] %v838
        %897 = vst [vmem:[%s876 + $0x240] sm:$0xff] %v842
        %898 = vst [vmem:[%s876 + $0x248] sm:$0xff] %v844
        %899 = vst [vmem:[%s876 + $0x260] sm:$0xff] %v848
        %900 = vst [vmem:[%s876 + $0x268] sm:$0xff] %v850
        %901 = vst [vmem:[%s876 + $0x300] sm:$0xff] %v854
        %902 = vst [vmem:[%s876 + $0x308] sm:$0xff] %v856
        %903 = vst [vmem:[%s876 + $0x320] sm:$0xff] %v860
        %904 = vst [vmem:[%s876 + $0x328] sm:$0xff] %v862
        %905 = vst [vmem:[%s876 + $0x340] sm:$0xff] %v866
        %906 = vst [vmem:[%s876 + $0x348] sm:$0xff] %v868
        %907 = vst [vmem:[%s876 + $0x360] sm:$0xff] %v872
        %908 = vst [vmem:[%s876 + $0x368] sm:$0xff] %v874
        %v909 = vld [vmem:[%s1 + $0x18] sm:$0xff]
        %v910 = vld [vmem:[%s2 + $0x6] sm:$0x3]
        %v912 = vlaneseq
        %v913 = vshrl.u32 %v912, 7
        %v914 = vsub.s32 0, %v913
        %v915 = vrot.slane %v910, %v914
        %v916 = vlaneseq
        %v917 = vshrl.u32 %v916, 7
        %v918 = vsub.s32 1, %v917
        %v919 = vrot.slane %v910, %v918
        %v923 = vcombine.high %v909, %v909
        %v924 = vsel %vm286, %v909, 0
        %v926 = vsel %vm286, %v923, 0
        %928 = vmatprep.subr.mxu0 %v926
        %929 = vmatpush1.msra.mxu0 %v924
        %930 = vmatprep.subr.mxu0 0.0
        %931 = vmatpush1.msra.mxu0 0.0
        %932 = vmatprep.subr.mxu0 0.0
        %933 = vmatpush1.msra.mxu0 0.0
        %934 = vmatprep.subr.mxu0 0.0
        %935 = vmatpush1.msra.mxu0 0.0
        %936 = vmatprep.subr.mxu0 0.0
        %937 = vmatpush1.msra.mxu0 0.0
        %938 = vmatprep.subr.mxu0 0.0
        %939 = vmatpush1.msra.mxu0 0.0
        %940 = vmatprep.subr.mxu0 0.0
        %941 = vmatpush1.msra.mxu0 0.0
        %942 = vmatprep.subr.mxu0 0.0
        %943 = vmatpush1.msra.mxu0 0.0
        %944 = vmatprep.subr.mxu0 0.0
        %945 = vmatpush1.msra.mxu0 0.0
        %946 = vmatprep.subr.mxu0 0.0
        %947 = vmatpush1.msra.mxu0 0.0
        %948 = vmatprep.subr.mxu0 0.0
        %949 = vmatpush1.msra.mxu0 0.0
        %950 = vmatprep.subr.mxu0 0.0
        %951 = vmatpush1.msra.mxu0 0.0
        %952 = vmatprep.subr.mxu0 0.0
        %953 = vmatpush1.msra.mxu0 0.0
        %954 = vmatprep.subr.mxu0 0.0
        %955 = vmatpush1.msra.mxu0 0.0
        %956 = vmatprep.subr.mxu0 0.0
        %957 = vmatpush1.msra.mxu0 0.0
        %958 = vmatprep.subr.mxu0 0.0
        %959 = vmatpush1.msra.mxu0 0.0
        %960 = vmatprep.subr.mxu0 0.0
        %961 = vmatpush1.msra.mxu0 0.0
        %962 = vmatprep.subr.mxu0 0.0
        %963 = vmatpush1.msra.mxu0 0.0
        %964 = vmatprep.subr.mxu0 0.0
        %965 = vmatpush1.msra.mxu0 0.0
        %966 = vmatprep.subr.mxu0 0.0
        %967 = vmatpush1.msra.mxu0 0.0
        %968 = vmatprep.subr.mxu0 0.0
        %969 = vmatpush1.msra.mxu0 0.0
        %970 = vmatprep.subr.mxu0 0.0
        %971 = vmatpush1.msra.mxu0 0.0
        %972 = vmatprep.subr.mxu0 0.0
        %973 = vmatpush1.msra.mxu0 0.0
        %974 = vmatprep.subr.mxu0 0.0
        %975 = vmatpush1.msra.mxu0 0.0
        %976 = vmatprep.subr.mxu0 0.0
        %977 = vmatpush1.msra.mxu0 0.0
        %978 = vmatprep.subr.mxu0 0.0
        %979 = vmatpush1.msra.mxu0 0.0
        %980 = vmatprep.subr.mxu0 0.0
        %981 = vmatpush1.msra.mxu0 0.0
        %982 = vmatprep.subr.mxu0 0.0
        %983 = vmatpush1.msra.mxu0 0.0
        %984 = vmatprep.subr.mxu0 0.0
        %985 = vmatpush1.msra.mxu0 0.0
        %986 = vmatprep.subr.mxu0 0.0
        %987 = vmatpush1.msra.mxu0 0.0
        %988 = vmatprep.subr.mxu0 0.0
        %989 = vmatpush1.msra.mxu0 0.0
        %990 = vmatprep.subr.mxu0 0.0
        %991 = vmatpush1.msra.mxu0 0.0
        %992 = vmatprep.mubr.f32.mxu0 0.0
        %993 = vmatmul.mubr.f32.gmra.mrb[0].mxu0 %v239
        %v994 = vpop.f32.mrb[0].mxu0
        %v995 = vadd.f32 %v915, %v994
        %v996 = vpop.f32.mrb[0].mxu0
        %v997 = vadd.f32 %v919, %v996
        %998 = vmatprep.mubr.f32.mxu0 0.0
        %999 = vmatmul.mubr.f32.gmra.mrb[0].mxu0 %v242
        %v1000 = vpop.f32.mrb[0].mxu0
        %v1001 = vadd.f32 %v915, %v1000
        %v1002 = vpop.f32.mrb[0].mxu0
        %v1003 = vadd.f32 %v919, %v1002
        %1004 = vmatprep.mubr.f32.mxu0 0.0
        %1005 = vmatmul.mubr.f32.gmra.mrb[0].mxu0 %v245
        %v1006 = vpop.f32.mrb[0].mxu0
        %v1007 = vadd.f32 %v915, %v1006
        %v1008 = vpop.f32.mrb[0].mxu0
        %v1009 = vadd.f32 %v919, %v1008
        %1010 = vmatprep.mubr.f32.mxu0 0.0
        %1011 = vmatmul.mubr.f32.gmra.mrb[0].mxu0 %v248
        %v1012 = vpop.f32.mrb[0].mxu0
        %v1013 = vadd.f32 %v915, %v1012
        %v1014 = vpop.f32.mrb[0].mxu0
        %v1015 = vadd.f32 %v919, %v1014
        %1016 = vmatprep.mubr.f32.mxu0 0.0
        %1017 = vmatmul.mubr.f32.gmra.mrb[0].mxu0 %v251
        %v1018 = vpop.f32.mrb[0].mxu0
        %v1019 = vadd.f32 %v915, %v1018
        %v1020 = vpop.f32.mrb[0].mxu0
        %v1021 = vadd.f32 %v919, %v1020
        %1022 = vmatprep.mubr.f32.mxu0 0.0
        %1023 = vmatmul.mubr.f32.gmra.mrb[0].mxu0 %v254
        %v1024 = vpop.f32.mrb[0].mxu0
        %v1025 = vadd.f32 %v915, %v1024
        %v1026 = vpop.f32.mrb[0].mxu0
        %v1027 = vadd.f32 %v919, %v1026
        %1028 = vmatprep.mubr.f32.mxu0 0.0
        %1029 = vmatmul.mubr.f32.gmra.mrb[0].mxu0 %v257
        %v1030 = vpop.f32.mrb[0].mxu0
        %v1031 = vadd.f32 %v915, %v1030
        %v1032 = vpop.f32.mrb[0].mxu0
        %v1033 = vadd.f32 %v919, %v1032
        %1034 = vmatprep.mubr.f32.mxu0 0.0
        %1035 = vmatmul.mubr.f32.gmra.mrb[0].mxu0 %v260
        %v1036 = vpop.f32.mrb[0].mxu0
        %v1037 = vadd.f32 %v915, %v1036
        %v1038 = vpop.f32.mrb[0].mxu0
        %v1039 = vadd.f32 %v919, %v1038
        %1040 = vmatprep.mubr.f32.mxu0 0.0
        %1041 = vmatmul.mubr.f32.gmra.mrb[0].mxu0 %v263
        %v1042 = vpop.f32.mrb[0].mxu0
        %v1043 = vadd.f32 %v915, %v1042
        %v1044 = vpop.f32.mrb[0].mxu0
        %v1045 = vadd.f32 %v919, %v1044
        %1046 = vmatprep.mubr.f32.mxu0 0.0
        %1047 = vmatmul.mubr.f32.gmra.mrb[0].mxu0 %v266
        %v1048 = vpop.f32.mrb[0].mxu0
        %v1049 = vadd.f32 %v915, %v1048
        %v1050 = vpop.f32.mrb[0].mxu0
        %v1051 = vadd.f32 %v919, %v1050
        %1052 = vmatprep.mubr.f32.mxu0 0.0
        %1053 = vmatmul.mubr.f32.gmra.mrb[0].mxu0 %v269
        %v1054 = vpop.f32.mrb[0].mxu0
        %v1055 = vadd.f32 %v915, %v1054
        %v1056 = vpop.f32.mrb[0].mxu0
        %v1057 = vadd.f32 %v919, %v1056
        %1058 = vmatprep.mubr.f32.mxu0 0.0
        %1059 = vmatmul.mubr.f32.gmra.mrb[0].mxu0 %v272
        %v1060 = vpop.f32.mrb[0].mxu0
        %v1061 = vadd.f32 %v915, %v1060
        %v1062 = vpop.f32.mrb[0].mxu0
        %v1063 = vadd.f32 %v919, %v1062
        %1064 = vmatprep.mubr.f32.mxu0 0.0
        %1065 = vmatmul.mubr.f32.gmra.mrb[0].mxu0 %v275
        %v1066 = vpop.f32.mrb[0].mxu0
        %v1067 = vadd.f32 %v915, %v1066
        %v1068 = vpop.f32.mrb[0].mxu0
        %v1069 = vadd.f32 %v919, %v1068
        %1070 = vmatprep.mubr.f32.mxu0 0.0
        %1071 = vmatmul.mubr.f32.gmra.mrb[0].mxu0 %v278
        %v1072 = vpop.f32.mrb[0].mxu0
        %v1073 = vadd.f32 %v915, %v1072
        %v1074 = vpop.f32.mrb[0].mxu0
        %v1075 = vadd.f32 %v919, %v1074
        %1076 = vmatprep.mubr.f32.mxu0 0.0
        %1077 = vmatmul.mubr.f32.gmra.mrb[0].mxu0 %v281
        %v1078 = vpop.f32.mrb[0].mxu0
        %v1079 = vadd.f32 %v915, %v1078
        %v1080 = vpop.f32.mrb[0].mxu0
        %v1081 = vadd.f32 %v919, %v1080
        %1082 = vmatprep.mubr.f32.mxu0 0.0
        %1083 = vmatmul.mubr.f32.gmra.mrb[0].mxu0 %v284
        %v1084 = vpop.f32.mrb[0].mxu0
        %v1085 = vadd.f32 %v915, %v1084
        %v1086 = vpop.f32.mrb[0].mxu0
        %v1087 = vadd.f32 %v919, %v1086
        %1088 = vdwg.mxu0
        %1089 = vst [vmem:[%s876 + $0x10] sm:$0xff] %v995
        %1090 = vst [vmem:[%s876 + $0x18] sm:$0xff] %v997
        %1091 = vst [vmem:[%s876 + $0x30] sm:$0xff] %v1001
        %1092 = vst [vmem:[%s876 + $0x38] sm:$0xff] %v1003
        %1093 = vst [vmem:[%s876 + $0x50] sm:$0xff] %v1007
        %1094 = vst [vmem:[%s876 + $0x58] sm:$0xff] %v1009
        %1095 = vst [vmem:[%s876 + $0x70] sm:$0xff] %v1013
        %1096 = vst [vmem:[%s876 + $0x78] sm:$0xff] %v1015
        %1097 = vst [vmem:[%s876 + $0x110] sm:$0xff] %v1019
        %1098 = vst [vmem:[%s876 + $0x118] sm:$0xff] %v1021
        %1099 = vst [vmem:[%s876 + $0x130] sm:$0xff] %v1025
        %1100 = vst [vmem:[%s876 + $0x138] sm:$0xff] %v1027
        %1101 = vst [vmem:[%s876 + $0x150] sm:$0xff] %v1031
        %1102 = vst [vmem:[%s876 + $0x158] sm:$0xff] %v1033
        %1103 = vst [vmem:[%s876 + $0x170] sm:$0xff] %v1037
        %1104 = vst [vmem:[%s876 + $0x178] sm:$0xff] %v1039
        %1105 = vst [vmem:[%s876 + $0x210] sm:$0xff] %v1043
        %1106 = vst [vmem:[%s876 + $0x218] sm:$0xff] %v1045
        %1107 = vst [vmem:[%s876 + $0x230] sm:$0xff] %v1049
        %1108 = vst [vmem:[%s876 + $0x238] sm:$0xff] %v1051
        %1109 = vst [vmem:[%s876 + $0x250] sm:$0xff] %v1055
        %1110 = vst [vmem:[%s876 + $0x258] sm:$0xff] %v1057
        %1111 = vst [vmem:[%s876 + $0x270] sm:$0xff] %v1061
        %1112 = vst [vmem:[%s876 + $0x278] sm:$0xff] %v1063
        %1113 = vst [vmem:[%s876 + $0x310] sm:$0xff] %v1067
        %1114 = vst [vmem:[%s876 + $0x318] sm:$0xff] %v1069
        %1115 = vst [vmem:[%s876 + $0x330] sm:$0xff] %v1073
        %1116 = vst [vmem:[%s876 + $0x338] sm:$0xff] %v1075
        %1117 = vst [vmem:[%s876 + $0x350] sm:$0xff] %v1079
        %1118 = vst [vmem:[%s876 + $0x358] sm:$0xff] %v1081
        %1119 = vst [vmem:[%s876 + $0x370] sm:$0xff] %v1085
        %1120 = vst [vmem:[%s876 + $0x378] sm:$0xff] %v1087
        %s1121 = sand.u32 %s109, 1
        %s1122 = scalar_lea.sflag [#allocation3], %s1121
        %s1123 = sand.u32 %s109, 1
        %s1124 = smul.addr %s1123, 1024
        %s1125 = scalar_lea.vmem [#allocation2], %s1124
        // Predicated region
        $region33: #{tpu_custom_call.1} parent=31 // pred_check
          %p1126 = pneg %p119
        $region34: #{tpu_custom_call.1} parent=31 // pred_check_branch
          %1128 = sbr.rel (%p1126) target = $region36
        $region35: #{tpu_custom_call.1} parent=31 // pred_region
          %s1129 = smul.u32 4, %s21
          %s1130 = smul.u32 4, %s22
          %s1132 = ssub.s32 16384, 16384
          %1133 = vsyncadd %s1122, %s1132
          %s1134 = smul.addr %s1130, 4
          %s1135 = smul.addr %s1129, 32
          %s1136 = sadd.s32 %s1134, %s1135
          %s1137 = smul.addr %s1136, 128
          %s1138 = scalar_lea.hbm %s3, %s1137
          %s1139 = sshll.u32 %s1125, 4
          %s1140 = int_to_ptr.vmem [resolvable:$true] %s1139
          %1145 = dma.vmem_to_hbm [thread:$0]  %s1140, 16384, %s1138, %s1122, 256, 256, 16
        $region36: #{tpu_custom_call.1} parent=31 // pred_fallthru
          _
      $region32: #{tpu_custom_call.1} parent=5 // pred_fallthru
        _
      %p1146 = scmp.le.s32.totalorder 2, %s12
      // Predicated region
      $region37: #{tpu_custom_call.1} parent=5 // pred_check
        %p1147 = pneg %p1146
      $region38: #{tpu_custom_call.1} parent=5 // pred_check_branch
        %1149 = sbr.rel (%p1147) target = $region40
      $region39: #{tpu_custom_call.1} parent=5 // pred_region
        %s1150 = ssub.s32 %s12, 2
        // Predicated region
        $region41: #{tpu_custom_call.1} parent=39 // pred_check
          %p1151 = pneg %p125
        $region42: #{tpu_custom_call.1} parent=39 // pred_check_branch
          %1153 = sbr.rel (%p1151) target = $region44
        $region43: #{tpu_custom_call.1} parent=39 // pred_region
          %s1154 = sand.u32 %s110, 1
          %s1155 = scalar_lea.sflag [#allocation3], %s1154
          %s1156 = sand.u32 %s110, 1
          %s1157 = smul.addr %s1156, 1024
          %s1158 = scalar_lea.vmem [#allocation2], %s1157
          %1159 = dma.done %s1155, 16384
        $region44: #{tpu_custom_call.1} parent=39 // pred_fallthru
          _
      $region40: #{tpu_custom_call.1} parent=5 // pred_fallthru
        _
    $region6: #{tpu_custom_call.1} parent=1 // loop_footer
      %s16 = sadd.s32 1, %s12
    $region7: #{tpu_custom_call.1} parent=1 // loop_footer_branch
      %11 = sbr.rel target = $region3
    $region8: #{tpu_custom_call.1} parent=1 // loop_exit
      _
    %1160 = vsyncpa [#allocation3], 1
    %s1161 = scalar_lea.sflag [#allocation3], 1
    %1162 = vsyncpa %s1161, 1

</llo_original>
